<compile_context>
chip_gen: v5e
topology: v5e:2x2
jax: 0.10.0
libtpu: 0.0.40
codegen_flags: <defaults>
</compile_context>

<pallas_src>
import functools

import numpy as np
import jax
import jax.numpy as jnp
from jax import lax
from jax.experimental import pallas as pl
from jax.experimental.pallas import tpu as pltpu


_LANE_WIDTH = 1024                     # lane-dense slab width (multiple of 128)
_TARGET_STEP_BYTES = 8 * 1024 * 1024   # combined (x + 2 outputs) bytes / grid step


def _round_up(a, m):
    return ((a + m - 1) // m) * m


def _obfuscator_kernel(seed_ref, x_ref, masked_ref, mask_ref, *,
                       threshold, block_rows, width):
    shape = x_ref.shape  # (block_rows, width)

    # Global flat element index == index into the original row-major x, so the
    # random stream is independent of slab width and of block_rows tiling.
    row = lax.broadcasted_iota(jnp.int32, shape, 0)
    col = lax.broadcasted_iota(jnp.int32, shape, 1)
    base = pl.program_id(0) * block_rows
    gidx = ((row + base) * width + col).astype(jnp.uint32)

    # Counter-based hash RNG: murmur3 fmix32 finalizer of (index ^ seed-mix).
    # Pure VPU integer ops -> portable (no pltpu.prng_* primitives needed).
    seed = seed_ref[0].astype(jnp.uint32)
    h = gidx ^ (seed * jnp.uint32(0x9E3779B9))
    h = h ^ (h >> 16)
    h = h * jnp.uint32(0x85EBCA6B)
    h = h ^ (h >> 13)
    h = h * jnp.uint32(0xC2B2AE35)
    h = h ^ (h >> 16)

    # Bernoulli(p): integer threshold compare on the raw 32-bit hash.
    mask = (h < jnp.uint32(threshold)).astype(x_ref.dtype)

    # (1 - mask) * x keeps torch's NaN/Inf propagation on masked entries.
    masked_ref[...] = ((1 - mask) * x_ref[...]).astype(masked_ref.dtype)
    mask_ref[...] = mask.astype(mask_ref.dtype)


def random_obfuscator(x, pretraining_ratio, seed=0, *, block_rows=None,
                      mask_dtype=None):
    """Pallas forward of RandomObfuscator.

    Args:
      x: input features, shape [batch_size, num_features] (any shape works).
      pretraining_ratio: probability of obfuscating each feature entry.
      seed: int32 seed for the in-kernel counter-hash RNG.
      block_rows: rows of the lane-dense slab per grid step (auto by default).
      mask_dtype: dtype of the returned mask; defaults to x.dtype (exact 0/1).
        Cast to float32 outside if the downstream loss needs it.

    Returns:
      (masked_input, obfuscated_vars) with the same shape as x.
    """
    orig_shape = x.shape
    total = int(x.size)
    if mask_dtype is None:
        mask_dtype = x.dtype
    mask_dtype = jnp.dtype(mask_dtype)

    p = min(max(float(pretraining_ratio), 0.0), 1.0)
    threshold = min(int(round(p * 2.0 ** 32)), 2 ** 32 - 1)

    # --- Lane-dense slab layout (pure layout plumbing for this elementwise op)
    width = min(_LANE_WIDTH, _round_up(total, 128))
    padded_total = _round_up(total, width)
    rows = padded_total // width

    xf = x.reshape(-1)
    if padded_total != total:
        xf = jnp.pad(xf, (0, padded_total - total))
    x2 = xf.reshape(rows, width)

    # --- Row-block size from a VMEM byte budget; >= 4 steps on non-trivial inputs
    bytes_per_row = width * (2 * x.dtype.itemsize + mask_dtype.itemsize)
    budget_rows = max(8, (_TARGET_STEP_BYTES // bytes_per_row) // 8 * 8)
    if block_rows is None:
        block_rows = min(rows, budget_rows)
        if rows >= 32:
            block_rows = min(block_rows, _round_up(-(-rows // 4), 8))
    block_rows = max(1, min(int(block_rows), rows))
    if block_rows != rows:
        # Partial blocks must satisfy the (8, 128) tiling constraint.
        block_rows = min(rows, max(8, (block_rows // 8) * 8))
    num_steps = -(-rows // block_rows)

    kernel = functools.partial(_obfuscator_kernel, threshold=threshold,
                               block_rows=block_rows, width=width)
    seed_arr = jnp.full((1,), seed, dtype=jnp.int32)
    row_tile = lambda i, seed_ref: (i, 0)  # same row tile for input and outputs

    masked2, mask2 = pl.pallas_call(
        kernel,
        out_shape=(jax.ShapeDtypeStruct((rows, width), x.dtype),
                   jax.ShapeDtypeStruct((rows, width), mask_dtype)),
        grid_spec=pltpu.PrefetchScalarGridSpec(
            num_scalar_prefetch=1,
            grid=(num_steps,),
            in_specs=[pl.BlockSpec((block_rows, width), row_tile)],
            out_specs=[pl.BlockSpec((block_rows, width), row_tile),
                       pl.BlockSpec((block_rows, width), row_tile)],
        ),
        compiler_params=pltpu.CompilerParams(
            dimension_semantics=("parallel",)),
    )(seed_arr, x2)

    masked_flat = masked2.reshape(-1)
    mask_flat = mask2.reshape(-1)
    if padded_total != total:
        masked_flat = masked_flat[:total]
        mask_flat = mask_flat[:total]
    return masked_flat.reshape(orig_shape), mask_flat.reshape(orig_shape)


if __name__ == "__main__":
    key = jax.random.PRNGKey(0)
    B, F = 16, 32          # [batch_size, num_features]
    P = 0.2                # pretraining_ratio

    x = jax.random.normal(key, (B, F), dtype=jnp.float32)

    masked, mask = jax.block_until_ready(random_obfuscator(x, P, seed=0))
    masked_np = np.asarray(masked)
    mask_np = np.asarray(mask)
    x_np = np.asarray(x)

    assert masked_np.shape == (B, F) and mask_np.shape == (B, F)
    # Mask entries are exactly 0 or 1 (Bernoulli samples).
    assert np.all((mask_np == 0.0) | (mask_np == 1.0))
    # masked_input == (1 - mask) * x, elementwise and exact.
    np.testing.assert_allclose(masked_np, (1.0 - mask_np) * x_np, rtol=0, atol=0)

    # Deterministic for a fixed seed; different masks for a different seed.
    masked2, mask2 = jax.block_until_ready(random_obfuscator(x, P, seed=0))
    np.testing.assert_array_equal(np.asarray(mask2), mask_np)
    np.testing.assert_array_equal(np.asarray(masked2), masked_np)
    _, mask3 = jax.block_until_ready(random_obfuscator(x, P, seed=123))
    assert not np.array_equal(np.asarray(mask3), mask_np)

    # Bigger, multi-grid-step run: Bernoulli-rate sanity check and
    # tiling-independence of the random stream (flat-index-based RNG).
    xb = jax.random.normal(key, (1024, 256), dtype=jnp.float32)
    _, mask_big = jax.block_until_ready(random_obfuscator(xb, P, seed=7))
    rate = float(np.asarray(mask_big).mean())
    assert abs(rate - P) < 0.02, f"empirical obfuscation rate {rate} != {P}"
    _, mask_big2 = jax.block_until_ready(
        random_obfuscator(xb, P, seed=7, block_rows=32))
    np.testing.assert_array_equal(np.asarray(mask_big2), np.asarray(mask_big))

    print("KERNEL_OK")
</pallas_src>

<mosaic_0001>
module attributes {stable_mosaic.version = 11 : i64} {
  func.func @_obfuscator_kernel(%arg0: i32, %arg1: memref<1xi32, #tpu.memory_space<smem>>, %arg2: memref<1x512xf32, #tpu.memory_space<vmem>>, %arg3: memref<1x512xf32, #tpu.memory_space<vmem>>, %arg4: memref<1x512xf32, #tpu.memory_space<vmem>>) attributes {dimension_semantics = [#tpu.dimension_semantics<parallel>], iteration_bounds = array<i64: 1>, scalar_prefetch = 1 : i64, scratch_operands = 0 : i64, tpu.core_type = #tpu.core_type<tc>, window_params = [{transform_indices = @transform_0, window_bounds = array<i64: 1, 512>}, {transform_indices = @transform_1, window_bounds = array<i64: 1, 512>}, {transform_indices = @transform_2, window_bounds = array<i64: 1, 512>}]} {
    %0 = tpu.iota {dimensions = array<i32: 0>} : vector<1x512xi32>
    %1 = tpu.iota {dimensions = array<i32: 1>} : vector<1x512xi32>
    %c1_i32 = arith.constant 1 : i32
    %2 = arith.muli %arg0, %c1_i32 : i32
    %3 = vector.broadcast %2 : i32 to vector<1x512xi32>
    %4 = arith.addi %0, %3 : vector<1x512xi32>
    %c512_i32 = arith.constant 512 : i32
    %5 = vector.broadcast %c512_i32 : i32 to vector<1x512xi32>
    %6 = arith.muli %4, %5 : vector<1x512xi32>
    %7 = arith.addi %6, %1 : vector<1x512xi32>
    %c0 = arith.constant 0 : index
    %8 = memref.load %arg1[%c0] : memref<1xi32, #tpu.memory_space<smem>>
    %c-1640531527_i32 = arith.constant -1640531527 : i32
    %9 = arith.muli %8, %c-1640531527_i32 : i32
    %10 = vector.broadcast %9 : i32 to vector<1x512xi32>
    %11 = arith.xori %7, %10 : vector<1x512xi32>
    %c16_i32 = arith.constant 16 : i32
    %12 = vector.broadcast %c16_i32 : i32 to vector<1x512xi32>
    %13 = arith.shrui %11, %12 : vector<1x512xi32>
    %14 = arith.xori %11, %13 : vector<1x512xi32>
    %c-2048144789_i32 = arith.constant -2048144789 : i32
    %15 = vector.broadcast %c-2048144789_i32 : i32 to vector<1x512xi32>
    %16 = arith.muli %14, %15 : vector<1x512xi32>
    %c13_i32 = arith.constant 13 : i32
    %17 = vector.broadcast %c13_i32 : i32 to vector<1x512xi32>
    %18 = arith.shrui %16, %17 : vector<1x512xi32>
    %19 = arith.xori %16, %18 : vector<1x512xi32>
    %c-1028477387_i32 = arith.constant -1028477387 : i32
    %20 = vector.broadcast %c-1028477387_i32 : i32 to vector<1x512xi32>
    %21 = arith.muli %19, %20 : vector<1x512xi32>
    %c16_i32_0 = arith.constant 16 : i32
    %22 = vector.broadcast %c16_i32_0 : i32 to vector<1x512xi32>
    %23 = arith.shrui %21, %22 : vector<1x512xi32>
    %24 = arith.xori %21, %23 : vector<1x512xi32>
    %c858993459_i32 = arith.constant 858993459 : i32
    %25 = vector.broadcast %c858993459_i32 : i32 to vector<1x512xi32>
    %26 = arith.cmpi ult, %24, %25 : vector<1x512xi32>
    %27 = arith.extui %26 : vector<1x512xi1> to vector<1x512xi32>
    %28 = arith.sitofp %27 : vector<1x512xi32> to vector<1x512xf32>
    %cst = arith.constant 1.000000e+00 : f32
    %29 = vector.broadcast %cst : f32 to vector<1x512xf32>
    %30 = arith.subf %29, %28 : vector<1x512xf32>
    %c0_1 = arith.constant 0 : index
    %c0_2 = arith.constant 0 : index
    %31 = vector.load %arg2[%c0_1, %c0_2] : memref<1x512xf32, #tpu.memory_space<vmem>>, vector<1x512xf32>
    %32 = arith.mulf %30, %31 : vector<1x512xf32>
    %c0_3 = arith.constant 0 : index
    %c0_4 = arith.constant 0 : index
    %33 = vector.load %arg3[%c0_3, %c0_4] : memref<1x512xf32, #tpu.memory_space<vmem>>, vector<1x512xf32>
    tpu.vector_store %arg3[%c0_3, %c0_4], %32 {strides = array<i32>} : memref<1x512xf32, #tpu.memory_space<vmem>>, vector<1x512xf32>,
    %c0_5 = arith.constant 0 : index
    %c0_6 = arith.constant 0 : index
    %34 = vector.load %arg4[%c0_5, %c0_6] : memref<1x512xf32, #tpu.memory_space<vmem>>, vector<1x512xf32>
    tpu.vector_store %arg4[%c0_5, %c0_6], %28 {strides = array<i32>} : memref<1x512xf32, #tpu.memory_space<vmem>>, vector<1x512xf32>,
    return
  }
  func.func @transform_0(%arg0: i32, %arg1: memref<1xi32, #tpu.memory_space<smem>>) -> (i32, i32) {
    %c0_i32 = arith.constant 0 : i32
    %c0_i32_0 = arith.constant 0 : i32
    return %arg0, %c0_i32 : i32, i32
  }
  func.func @transform_1(%arg0: i32, %arg1: memref<1xi32, #tpu.memory_space<smem>>) -> (i32, i32) {
    %c0_i32 = arith.constant 0 : i32
    %c0_i32_0 = arith.constant 0 : i32
    return %arg0, %c0_i32 : i32, i32
  }
  func.func @transform_2(%arg0: i32, %arg1: memref<1xi32, #tpu.memory_space<smem>>) -> (i32, i32) {
    %c0_i32 = arith.constant 0 : i32
    %c0_i32_0 = arith.constant 0 : i32
    return %arg0, %c0_i32 : i32, i32
  }
}

</mosaic_0001>

<llo_original>
// kernel: tpu_custom_call.1
$region0: #{tpu_custom_call.1}
  #allocation0 [shape = 'u32[]', space=smem, size = 0x4, offset = 0x4, fixed_abs, tag = 'smem constant byte address 0x4 - core index']
  #allocation1 [shape = 'u32[72,128]{1,0:T(1,128)}', space=vmem, size = 0x9000, scoped, tag = 'internal scratch']
  #allocation2 [shape = 's32[1]{0}', space=sflag, size = 0x4, scoped, tag = 'scoped memory for tpu_custom_call.1']
  #allocation3 [shape = 's32[1]{0:T(128)S(6)}', space=smem, size = 0x200, scoped, tag = 'prefetched SMEM operand 0']
  %s0 = inlined_call_operand.<no memory space> [shape: s32[1], index: 0, kind: input, shape index: {}]
  %s1 = inlined_call_operand.hbm [shape: f32[1,512], index: 1, kind: input, shape index: {}]
  %s2 = inlined_call_operand.hbm [shape: f32[1,512], index: 2, kind: output, shape index: {0}]
  %s3 = inlined_call_operand.hbm [shape: f32[1,512], index: 3, kind: output, shape index: {1}]
  %4 = xla_tuple %s2, %s3
  %s5 = sld [smem:[#allocation0]]
  $region26: #{tpu_custom_call.1} parent=0
    _
  %s7 = ssub.s32 1, %s5
  %s8 = scalar_select 0, %s7, %s5
  %9 = sst [smem:[#allocation3]] %s0
  $region1: #{tpu_custom_call.1} parent=0
    #allocation4 [shape = 'u8[2048]{0}', space=vmem, size = 0x800, scoped, tag = 'input window, operand 1, single buffered']
    #allocation5 [shape = 's32[1]{0}', space=sflag, size = 0x4, scoped, tag = 'scoped memory for tpu_custom_call.1']
    #allocation6 [shape = 's32[1]{0}', space=sflag, size = 0x4, scoped, tag = 'scoped memory for tpu_custom_call.1']
    #allocation7 [shape = 'u8[2048]{0}', space=vmem, size = 0x800, scoped, tag = 'output window, operand 0, single buffered']
    #allocation8 [shape = 'u8[2048]{0}', space=vmem, size = 0x800, scoped, tag = 'output window, operand 1, single buffered']
    #allocation9 [shape = 's32[1]{0}', space=sflag, size = 0x4, scoped, tag = 'scoped memory for tpu_custom_call.1']
    %10 = vsyncpa [#allocation5], 0
    %11 = vsyncpa [#allocation6], 0
    %12 = vsyncpa [#allocation9], 0
    // Predicated region
    $region2: #{tpu_custom_call.1} parent=1 // pred_check
      _
    $region3: #{tpu_custom_call.1} parent=1 // pred_check_branch
      %14 = sbr.rel (0) target = $region5
    $region4: #{tpu_custom_call.1} parent=1 // pred_region
      %16 = vsyncadd [#allocation5], 0
      %s18 = sshll.u32 %s1, 4
      %s19 = int_to_ptr.hbm [resolvable:$true] %s18
      %s20 = sshll.u32 [#allocation4], 4
      %s21 = int_to_ptr.vmem [resolvable:$true] %s20
      %23 = dma.hbm_to_vmem [thread:$0]  %s19, 64, %s21, [#allocation5]
    $region5: #{tpu_custom_call.1} parent=1 // pred_fallthru
      _
    // Predicated region
    $region6: #{tpu_custom_call.1} parent=1 // pred_check
      _
    $region7: #{tpu_custom_call.1} parent=1 // pred_check_branch
      %25 = sbr.rel (0) target = $region9
    $region8: #{tpu_custom_call.1} parent=1 // pred_region
      %27 = dma.done [#allocation5], 64
    $region9: #{tpu_custom_call.1} parent=1 // pred_fallthru
      _
    %v28 = vlaneseq
    %v29 = vshrl.u32 %v28, 7
    %v30 = vlaneseq
    %v31 = vand.u32 %v30, 127
    %v32 = vadd.s32 %v31, 128
    %v33 = vadd.s32 %v31, 256
    %v34 = vadd.s32 %v31, 384
    %v35 = vstv 0
    %v36 = vadd.s32 %v29, %v35
    %v37 = vmul.u32 %v36, 512
    %v38 = vadd.s32 %v37, %v31
    %v39 = vadd.s32 %v37, %v32
    %v40 = vadd.s32 %v37, %v33
    %v41 = vadd.s32 %v37, %v34
    %s42 = sld [smem:[#allocation3]]
    %s43 = smul.u32 %s42, 2654435769
    %v44 = vstv %s43
    %v45 = vxor.u32 %v38, %v44
    %v46 = vxor.u32 %v39, %v44
    %v47 = vxor.u32 %v40, %v44
    %v48 = vxor.u32 %v41, %v44
    %v49 = vshrl.u32 %v45, 16
    %v50 = vshrl.u32 %v46, 16
    %v51 = vshrl.u32 %v47, 16
    %v52 = vshrl.u32 %v48, 16
    %v53 = vxor.u32 %v45, %v49
    %v54 = vxor.u32 %v46, %v50
    %v55 = vxor.u32 %v47, %v51
    %v56 = vxor.u32 %v48, %v52
    %v57 = vmul.u32 %v53, 2246822507
    %v58 = vmul.u32 %v54, 2246822507
    %v59 = vmul.u32 %v55, 2246822507
    %v60 = vmul.u32 %v56, 2246822507
    %v61 = vshrl.u32 %v57, 13
    %v62 = vshrl.u32 %v58, 13
    %v63 = vshrl.u32 %v59, 13
    %v64 = vshrl.u32 %v60, 13
    %v65 = vxor.u32 %v57, %v61
    %v66 = vxor.u32 %v58, %v62
    %v67 = vxor.u32 %v59, %v63
    %v68 = vxor.u32 %v60, %v64
    %v69 = vmul.u32 %v65, 3266489909
    %v70 = vmul.u32 %v66, 3266489909
    %v71 = vmul.u32 %v67, 3266489909
    %v72 = vmul.u32 %v68, 3266489909
    %v73 = vshrl.u32 %v69, 16
    %v74 = vshrl.u32 %v70, 16
    %v75 = vshrl.u32 %v71, 16
    %v76 = vshrl.u32 %v72, 16
    %v77 = vxor.u32 %v69, %v73
    %v78 = vxor.u32 %v70, %v74
    %v79 = vxor.u32 %v71, %v75
    %v80 = vxor.u32 %v72, %v76
    %v81 = vadd.s32 %v77, 2147483648
    %vm83 = vcmp.lt.s32.totalorder %v81, 3006477107
    %v84 = vadd.s32 %v78, 2147483648
    %vm86 = vcmp.lt.s32.totalorder %v84, 3006477107
    %v87 = vadd.s32 %v79, 2147483648
    %vm89 = vcmp.lt.s32.totalorder %v87, 3006477107
    %v90 = vadd.s32 %v80, 2147483648
    %vm92 = vcmp.lt.s32.totalorder %v90, 3006477107
    %v93 = vsel %vm83, 1, 0
    %v94 = vsel %vm86, 1, 0
    %v95 = vsel %vm89, 1, 0
    %v96 = vsel %vm92, 1, 0
    %v97 = vcvt.s32.f32 %v93
    %v98 = vcvt.s32.f32 %v94
    %v99 = vcvt.s32.f32 %v95
    %v100 = vcvt.s32.f32 %v96
    %v101 = vsub.f32 1.0, %v97
    %v102 = vsub.f32 1.0, %v98
    %v103 = vsub.f32 1.0, %v99
    %v104 = vsub.f32 1.0, %v100
    %v105 = vld [vmem:[#allocation4] sm:$0xf]
    %v107 = vperm.slane %v105, 0
    %v108 = vperm.slane %v105, 1
    %v109 = vperm.slane %v105, 2
    %v110 = vperm.slane %v105, 3
    %v115 = vmul.f32 %v101, %v107
    %v116 = vmul.f32 %v102, %v108
    %v117 = vmul.f32 %v103, %v109
    %v118 = vmul.f32 %v104, %v110
    %v123 = vrot.slane %v116, 7
    %v124 = vrot.slane %v117, 6
    %v125 = vrot.slane %v118, 5
    %vm126 = vcmask 1040384
    %v127 = vsel %vm126, %v115, %v123
    %vm128 = vcmask 1042434
    %v129 = vsel %vm128, %v124, %v125
    %vm130 = vcmask 1041408
    %v131 = vsel %vm130, %v127, %v129
    %v133 = vlaneseq
    %vm134 = vcmp.ge.s32.totalorder %v133, 0
    %vm135 = vcmp.lt.s32.totalorder %v133, 512
    %vm136 = vmand %vm134, %vm135
    %137 = vst.msk [vmem:[#allocation7] sm:$0xf] %vm136, %v131
    %v142 = vrot.slane %v98, 7
    %v143 = vrot.slane %v99, 6
    %v144 = vrot.slane %v100, 5
    %v145 = vsel %vm126, %v97, %v142
    %v146 = vsel %vm128, %v143, %v144
    %v147 = vsel %vm130, %v145, %v146
    %149 = vst.msk [vmem:[#allocation8] sm:$0xf] %vm136, %v147
    // Predicated region
    $region10: #{tpu_custom_call.1} parent=1 // pred_check
      _
    $region11: #{tpu_custom_call.1} parent=1 // pred_check_branch
      %151 = sbr.rel (0) target = $region13
    $region12: #{tpu_custom_call.1} parent=1 // pred_region
      %153 = vsyncadd [#allocation6], 0
      %s155 = sshll.u32 [#allocation7], 4
      %s156 = int_to_ptr.vmem [resolvable:$true] %s155
      %s157 = sshll.u32 %s2, 4
      %s158 = int_to_ptr.hbm [resolvable:$true] %s157
      %160 = dma.vmem_to_hbm [thread:$0]  %s156, 64, %s158, [#allocation6]
    $region13: #{tpu_custom_call.1} parent=1 // pred_fallthru
      _
    // Predicated region
    $region14: #{tpu_custom_call.1} parent=1 // pred_check
      _
    $region15: #{tpu_custom_call.1} parent=1 // pred_check_branch
      %162 = sbr.rel (0) target = $region17
    $region16: #{tpu_custom_call.1} parent=1 // pred_region
      %164 = vsyncadd [#allocation9], 0
      %s166 = sshll.u32 [#allocation8], 4
      %s167 = int_to_ptr.vmem [resolvable:$true] %s166
      %s168 = sshll.u32 %s3, 4
      %s169 = int_to_ptr.hbm [resolvable:$true] %s168
      %171 = dma.vmem_to_hbm [thread:$0]  %s167, 64, %s169, [#allocation9]
    $region17: #{tpu_custom_call.1} parent=1 // pred_fallthru
      _
    // Predicated region
    $region18: #{tpu_custom_call.1} parent=1 // pred_check
      _
    $region19: #{tpu_custom_call.1} parent=1 // pred_check_branch
      %173 = sbr.rel (0) target = $region21
    $region20: #{tpu_custom_call.1} parent=1 // pred_region
      %175 = dma.done [#allocation6], 64
    $region21: #{tpu_custom_call.1} parent=1 // pred_fallthru
      _
    // Predicated region
    $region22: #{tpu_custom_call.1} parent=1 // pred_check
      _
    $region23: #{tpu_custom_call.1} parent=1 // pred_check_branch
      %177 = sbr.rel (0) target = $region25
    $region24: #{tpu_custom_call.1} parent=1 // pred_region
      %179 = dma.done [#allocation9], 64
    $region25: #{tpu_custom_call.1} parent=1 // pred_fallthru
      _
    %180 = vsyncpa [#allocation5], 1
    %181 = vsyncpa [#allocation6], 1
    %182 = vsyncpa [#allocation9], 1

</llo_original>
